<compile_context>
chip_gen: v7x
topology: tpu7x:2x2x1
jax: 0.10.0
libtpu: 0.0.40
codegen_flags: <defaults>
</compile_context>

<pallas_src>
import jax
import jax.numpy as jnp
from jax.experimental import pallas as pl
from jax.experimental.pallas import tpu as pltpu

LANE = 128
SUBLANE = 8

VMEM_LIMIT_BYTES = 32 * 1024 * 1024   # above v5e's 16 MiB default, safe on v6e/v7x (64 MiB phys)
TILE_VMEM_BUDGET = 20 * 1024 * 1024   # budget for the N-dependent (tile-sized) buffers


def _cdiv(a, b):
    return -(-a // b)


def _round_up(x, mult):
    return ((x + mult - 1) // mult) * mult


def _pad_to(a, axis, new_size):
    if a.shape[axis] == new_size:
        return a
    pad = [(0, 0)] * a.ndim
    pad[axis] = (0, new_size - a.shape[axis])
    return jnp.pad(a, pad)


def _choose_tn(N, dx, x_itemsize, H1p, tn):
    """Rows per grid step: target ~1 MiB of X per tile, capped by a VMEM budget."""
    if tn is None:
        tn = max(512, (1 << 20) // max(1, dx * x_itemsize))
    # 2x double-buffered X tile + ~3 live (TN, H1p) f32 temporaries.
    per_row = 2 * dx * x_itemsize + 3 * H1p * 4
    cap = max(SUBLANE, TILE_VMEM_BUDGET // per_row)
    tn = max(SUBLANE, min(tn, cap, _round_up(N, SUBLANE)))
    return _round_up(tn, SUBLANE)


def _encoder_stream(f2, X, W1f, W1x, b1p, *, N, dx, dF, H1p, cd, tn, num_cores):
    """Streams X and returns per-core partial sums of relu(X@W1x + F@W1f + b1).

    Output shape: (C*8, H1p) f32 -- C per-core (8, H1p) sublane-aligned partials.
    """
    TN = _choose_tn(N, dx, X.dtype.itemsize, H1p, tn)
    n_data_tiles = _cdiv(N, TN)
    C = max(1, min(num_cores, n_data_tiles))       # no-op split on single-TC chips
    npc = _cdiv(n_data_tiles, C)                   # tiles per core
    total_tiles = C * npc
    any_pad = (total_tiles * TN != N)              # ragged last tile / grid padding
    x_dtype = X.dtype

    def x_index_map(c, i):
        t = c * npc + i
        if total_tiles > n_data_tiles:
            # Grid-padding tiles re-read the last real block; they are fully masked.
            t = jnp.minimum(t, n_data_tiles - 1)
        return (t, 0)

    def kernel(f_ref, x_ref, w1f_ref, w1x_ref, b1_ref, hs_ref, b1eff_ref):
        i = pl.program_id(1)

        @pl.when(i == 0)
        def _init():
            hs_ref[...] = jnp.zeros_like(hs_ref)
            # Fold all F-dependent encoder terms into one effective bias (once/core).
            b1eff_ref[...] = (
                jnp.dot(f_ref[...], w1f_ref[...],
                        preferred_element_type=jnp.float32) + b1_ref[...])

        xt = x_ref[...]
        if x_dtype != cd:
            xt = xt.astype(cd)
        h1 = jnp.maximum(
            jnp.dot(xt, w1x_ref[...], preferred_element_type=jnp.float32)
            + b1eff_ref[...], 0.0)                               # (TN, H1p) f32

        def _accumulate(h):
            # Sublane-aligned partial reduce: (TN, H1p) -> (8, H1p), accumulated
            # straight into the resident output block (no cross-sublane reduce).
            hs_ref[...] += jnp.sum(h.reshape(TN // SUBLANE, SUBLANE, H1p), axis=0)

        if any_pad:
            start = (pl.program_id(0) * npc + i) * TN
            ragged = start + TN > N            # only tiles that contain padding
            @pl.when(ragged)
            def _masked():
                row = jax.lax.broadcasted_iota(jnp.int32, (TN, 1), 0) + start
                _accumulate(jnp.where(row < N, h1, 0.0))
            @pl.when(jnp.logical_not(ragged))
            def _plain():
                _accumulate(h1)
        else:
            _accumulate(h1)

    # TODO(synk): pl.Buffered(1) on the constant-index weight specs would halve
    # their (tiny) VMEM footprint; left out to keep the lowering surface minimal.
    const = lambda c, i: (0, 0)
    in_specs = [
        pl.BlockSpec((1, dF), const),              # F
        pl.BlockSpec((TN, dx), x_index_map),       # X tile (only array scaling w/ N)
        pl.BlockSpec((dF, H1p), const),            # W1f
        pl.BlockSpec((dx, H1p), const),            # W1x
        pl.BlockSpec((1, H1p), const),             # b1
    ]
    out_specs = pl.BlockSpec((SUBLANE, H1p), lambda c, i: (c, 0))

    flops = 2 * total_tiles * TN * dx * H1p + 2 * dF * H1p
    bytes_accessed = (N * dx * X.dtype.itemsize
                      + dF * H1p * 4 + dx * H1p * jnp.dtype(cd).itemsize
                      + (dF + H1p) * 4 + C * SUBLANE * H1p * 4)

    return pl.pallas_call(
        kernel,
        out_shape=jax.ShapeDtypeStruct((C * SUBLANE, H1p), jnp.float32),
        grid_spec=pltpu.PrefetchScalarGridSpec(
            num_scalar_prefetch=0,
            grid=(C, npc),
            in_specs=in_specs,
            out_specs=out_specs,
            scratch_shapes=[pltpu.VMEM((1, H1p), jnp.float32)],   # b1_eff
        ),
        compiler_params=pltpu.CompilerParams(
            dimension_semantics=("parallel", "arbitrary"),
            vmem_limit_bytes=VMEM_LIMIT_BYTES),
        cost_estimate=pl.CostEstimate(flops=int(flops), transcendentals=0,
                                      bytes_accessed=int(bytes_accessed)),
    )(f2, X, W1f, W1x, b1p)


def _decoder(hs, f2, W2p, b2p, V1f, V1e, c1p, V2p, c2p, *, N, doutp):
    """One-shot f32 epilogue: enc = sum(hs)@W2 + N*b2; out = decoder(cat[F, enc])."""
    def kernel(hs_ref, f_ref, w2_ref, b2_ref, v1f_ref, v1e_ref, c1_ref,
               v2_ref, c2_ref, out_ref):
        hsum = jnp.sum(hs_ref[...], axis=0, keepdims=True)                # (1, H1p)
        enc = (jnp.dot(hsum, w2_ref[...], preferred_element_type=jnp.float32)
               + jnp.float32(N) * b2_ref[...])                            # (1, mp)
        d_bias = (jnp.dot(f_ref[...], v1f_ref[...],
                          preferred_element_type=jnp.float32) + c1_ref[...])
        d_h = jnp.maximum(
            jnp.dot(enc, v1e_ref[...], preferred_element_type=jnp.float32)
            + d_bias, 0.0)
        out_ref[...] = (jnp.dot(d_h, v2_ref[...],
                                preferred_element_type=jnp.float32)
                        + c2_ref[...])                                    # (1, doutp)

    return pl.pallas_call(
        kernel,
        out_shape=jax.ShapeDtypeStruct((1, doutp), jnp.float32),
        compiler_params=pltpu.CompilerParams(vmem_limit_bytes=VMEM_LIMIT_BYTES),
    )(hs, f2, W2p, b2p, V1f, V1e, c1p, V2p, c2p)


def dynamic_encoder_forward(F, X, params, *, compute_dtype=jnp.float32,
                            tn=None, num_cores=2):
    """F: (dF,), X: (N, dx). Returns (dout,) float32.

    compute_dtype: dtype of the streamed X matmul (W1x + in-kernel X cast).
    Pass X already stored in bf16 (and compute_dtype=bf16) to halve HBM traffic.
    """
    dF = F.shape[0]
    N, dx = X.shape
    (W1, b1, W2, b2, V1, c1, V2, c2) = params
    H1, m = W2.shape
    H2, dout = V2.shape

    # Lane-dense padded feature dims (zero padding keeps the math exact).
    H1p = _round_up(H1, LANE)
    mp = _round_up(m, LANE)
    H2p = _round_up(H2, LANE)
    doutp = _round_up(dout, LANE)

    cd = jnp.dtype(compute_dtype)
    f2 = F.reshape(1, dF).astype(jnp.float32)

    # Encoder first layer, concat split. Only W1x rides the streaming dtype.
    W1f = _pad_to(W1[:dF], 1, H1p).astype(jnp.float32)                # (dF, H1p)
    W1x = _pad_to(W1[dF:], 1, H1p).astype(cd)                         # (dx, H1p)
    b1p = _pad_to(b1.reshape(1, H1), 1, H1p).astype(jnp.float32)      # (1, H1p)

    # Encoder second layer + decoder (one-shot epilogue, kept f32).
    W2p = _pad_to(_pad_to(W2, 0, H1p), 1, mp).astype(jnp.float32)     # (H1p, mp)
    b2p = _pad_to(b2.reshape(1, m), 1, mp).astype(jnp.float32)        # (1, mp)
    V1f = _pad_to(V1[:dF], 1, H2p).astype(jnp.float32)                # (dF, H2p)
    V1e = _pad_to(_pad_to(V1[dF:], 0, mp), 1, H2p).astype(jnp.float32)  # (mp, H2p)
    c1p = _pad_to(c1.reshape(1, H2), 1, H2p).astype(jnp.float32)      # (1, H2p)
    V2p = _pad_to(_pad_to(V2, 0, H2p), 1, doutp).astype(jnp.float32)  # (H2p, doutp)
    c2p = _pad_to(c2.reshape(1, dout), 1, doutp).astype(jnp.float32)  # (1, doutp)

    if N > 0:
        hs = _encoder_stream(f2, X, W1f, W1x, b1p, N=N, dx=dx, dF=dF, H1p=H1p,
                             cd=cd, tn=tn, num_cores=num_cores)
    else:
        # PyTorch `if X.numel() != 0` branch: enc must stay zeros.
        hs = jnp.zeros((SUBLANE, H1p), jnp.float32)

    out = _decoder(hs, f2, W2p, b2p, V1f, V1e, c1p, V2p, c2p, N=N, doutp=doutp)
    return out[0, :dout]


def reference_forward(F, X, params):
    """Pure-JAX reference, mathematically identical to the PyTorch loop (f32)."""
    (W1, b1, W2, b2, V1, c1, V2, c2) = params
    m = W2.shape[1]
    if X.shape[0] == 0:
        enc = jnp.zeros((m,), jnp.float32)
    else:
        inp = jnp.concatenate(
            [jnp.broadcast_to(F, (X.shape[0], F.shape[0])),
             X.astype(jnp.float32)], axis=1)
        h = jnp.maximum(inp @ W1 + b1, 0.0)
        enc = jnp.sum(h @ W2 + b2, axis=0)
    hcat = jnp.concatenate([F, enc])
    dh = jnp.maximum(hcat @ V1 + c1, 0.0)
    return dh @ V2 + c2


def make_params(key, dF, dx, H1, m, H2, dout):
    ks = jax.random.split(key, 8)
    s = 0.1
    W1 = s * jax.random.normal(ks[0], (dF + dx, H1), jnp.float32)
    b1 = s * jax.random.normal(ks[1], (H1,), jnp.float32)
    W2 = s * jax.random.normal(ks[2], (H1, m), jnp.float32)
    b2 = s * jax.random.normal(ks[3], (m,), jnp.float32)
    V1 = s * jax.random.normal(ks[4], (dF + m, H2), jnp.float32)
    c1 = s * jax.random.normal(ks[5], (H2,), jnp.float32)
    V2 = s * jax.random.normal(ks[6], (H2, dout), jnp.float32)
    c2 = s * jax.random.normal(ks[7], (dout,), jnp.float32)
    return (W1, b1, W2, b2, V1, c1, V2, c2)


if __name__ == "__main__":
    dF, dx = 16, 16                # F dim, per-object dim
    H1, m = 32, 16                 # encoder topology [dF+dx, H1, m]
    H2, dout = 32, 16              # decoder topology [dF+m, H2, dout]

    key = jax.random.PRNGKey(0)
    k_f, k_x, k_p = jax.random.split(key, 3)
    F = jax.random.normal(k_f, (dF,), jnp.float32)
    params = make_params(k_p, dF, dx, H1, m, H2, dout)

    # Small single-tile case (N=8).
    X8 = jax.random.normal(k_x, (8, dx), jnp.float32)
    out8 = jax.block_until_ready(dynamic_encoder_forward(F, X8, params))
    ref8 = reference_forward(F, X8, params)
    assert out8.shape == (dout,)
    assert jnp.allclose(out8, ref8, atol=1e-3, rtol=1e-3), (out8, ref8)

    # Multi-tile case exercising the 2-core grid split + ragged-tile masking.
    X300 = jax.random.normal(jax.random.fold_in(k_x, 1), (300, dx), jnp.float32)
    ref300 = reference_forward(F, X300, params)
    out300 = jax.block_until_ready(dynamic_encoder_forward(F, X300, params, tn=64))
    assert jnp.allclose(out300, ref300, atol=2e-3, rtol=2e-3), (out300, ref300)

    # bf16 streaming path (X stored in bf16 halves HBM traffic; accumulation and
    # the decoder epilogue stay f32); looser tolerance for the bf16 rounding.
    out_bf16 = jax.block_until_ready(
        dynamic_encoder_forward(F, X300.astype(jnp.bfloat16), params,
                                compute_dtype=jnp.bfloat16, tn=64))
    assert jnp.allclose(out_bf16, ref300, atol=1.0, rtol=0.05), (out_bf16, ref300)

    # N == 0 (PyTorch `if X.numel() != 0` branch): enc must stay zeros.
    X_empty = jnp.zeros((0, dx), jnp.float32)
    ref0 = reference_forward(F, X_empty, params)
    out0 = jax.block_until_ready(dynamic_encoder_forward(F, X_empty, params))
    assert jnp.allclose(out0, ref0, atol=1e-3, rtol=1e-3), (out0, ref0)

    print("KERNEL_OK")
</pallas_src>

<mosaic_0001>
module attributes {stable_mosaic.version = 11 : i64} {
  func.func @kernel(%arg0: i32, %arg1: i32, %arg2: memref<1x16xf32, #tpu.memory_space<vmem>>, %arg3: memref<8x16xf32, #tpu.memory_space<vmem>>, %arg4: memref<16x128xf32, #tpu.memory_space<vmem>>, %arg5: memref<16x128xf32, #tpu.memory_space<vmem>>, %arg6: memref<1x128xf32, #tpu.memory_space<vmem>>, %arg7: memref<8x128xf32, #tpu.memory_space<vmem>>, %arg8: memref<1x128xf32, #tpu.memory_space<vmem>>) attributes {dimension_semantics = [#tpu.dimension_semantics<parallel>, #tpu.dimension_semantics<arbitrary>], iteration_bounds = array<i64: 1, 1>, scalar_prefetch = 0 : i64, scratch_operands = 1 : i64, tpu.core_type = #tpu.core_type<tc>, window_params = [{pipeline_mode = #tpu.pipeline_mode<synchronous>, transform_indices = @transform_0, window_bounds = array<i64: 1, 16>}, {transform_indices = @transform_1, window_bounds = array<i64: 8, 16>}, {pipeline_mode = #tpu.pipeline_mode<synchronous>, transform_indices = @transform_2, window_bounds = array<i64: 16, 128>}, {pipeline_mode = #tpu.pipeline_mode<synchronous>, transform_indices = @transform_3, window_bounds = array<i64: 16, 128>}, {pipeline_mode = #tpu.pipeline_mode<synchronous>, transform_indices = @transform_4, window_bounds = array<i64: 1, 128>}, {transform_indices = @transform_5, window_bounds = array<i64: 8, 128>}]} {
    %c0_i32 = arith.constant 0 : i32
    %0 = arith.cmpi eq, %arg1, %c0_i32 : i32
    %1 = arith.extui %0 : i1 to i32
    %c0_i32_0 = arith.constant 0 : i32
    %2 = arith.cmpi ne, %1, %c0_i32_0 : i32
    scf.if %2 {
      %cst_12 = arith.constant 0.000000e+00 : f32
      %16 = vector.broadcast %cst_12 : f32 to vector<8x128xf32>
      %c0_13 = arith.constant 0 : index
      %c0_14 = arith.constant 0 : index
      %17 = vector.load %arg7[%c0_13, %c0_14] : memref<8x128xf32, #tpu.memory_space<vmem>>, vector<8x128xf32>
      tpu.vector_store %arg7[%c0_13, %c0_14], %16 {strides = array<i32>} : memref<8x128xf32, #tpu.memory_space<vmem>>, vector<8x128xf32>,
      %c0_15 = arith.constant 0 : index
      %c0_16 = arith.constant 0 : index
      %18 = vector.load %arg2[%c0_15, %c0_16] : memref<1x16xf32, #tpu.memory_space<vmem>>, vector<1x16xf32>
      %c0_17 = arith.constant 0 : index
      %c0_18 = arith.constant 0 : index
      %19 = vector.load %arg4[%c0_17, %c0_18] : memref<16x128xf32, #tpu.memory_space<vmem>>, vector<16x128xf32>
      %cst_19 = arith.constant dense<0.000000e+00> : vector<1x128xf32>
      %20 = tpu.matmul %18, %19, %cst_19 {dimension_numbers = #tpu.dot_dimension_numbers<[1], [0], [0], [1], [0, 0, 1, 1], [], []>} : vector<1x16xf32>, vector<16x128xf32>, vector<1x128xf32> -> vector<1x128xf32>
      %c0_20 = arith.constant 0 : index
      %c0_21 = arith.constant 0 : index
      %21 = vector.load %arg6[%c0_20, %c0_21] : memref<1x128xf32, #tpu.memory_space<vmem>>, vector<1x128xf32>
      %22 = arith.addf %20, %21 : vector<1x128xf32>
      %c0_22 = arith.constant 0 : index
      %c0_23 = arith.constant 0 : index
      %23 = vector.load %arg8[%c0_22, %c0_23] : memref<1x128xf32, #tpu.memory_space<vmem>>, vector<1x128xf32>
      tpu.vector_store %arg8[%c0_22, %c0_23], %22 {strides = array<i32>} : memref<1x128xf32, #tpu.memory_space<vmem>>, vector<1x128xf32>,
    } else {
    }
    %c0 = arith.constant 0 : index
    %c0_1 = arith.constant 0 : index
    %3 = vector.load %arg3[%c0, %c0_1] : memref<8x16xf32, #tpu.memory_space<vmem>>, vector<8x16xf32>
    %c0_2 = arith.constant 0 : index
    %c0_3 = arith.constant 0 : index
    %4 = vector.load %arg5[%c0_2, %c0_3] : memref<16x128xf32, #tpu.memory_space<vmem>>, vector<16x128xf32>
    %cst = arith.constant dense<0.000000e+00> : vector<8x128xf32>
    %5 = tpu.matmul %3, %4, %cst {dimension_numbers = #tpu.dot_dimension_numbers<[1], [0], [0], [1], [0, 0, 1, 1], [], []>} : vector<8x16xf32>, vector<16x128xf32>, vector<8x128xf32> -> vector<8x128xf32>
    %c0_4 = arith.constant 0 : index
    %c0_5 = arith.constant 0 : index
    %6 = vector.load %arg8[%c0_4, %c0_5] : memref<1x128xf32, #tpu.memory_space<vmem>>, vector<1x128xf32>
    %7 = vector.broadcast %6 : vector<1x128xf32> to vector<8x128xf32>
    %8 = arith.addf %5, %7 : vector<8x128xf32>
    %cst_6 = arith.constant 0.000000e+00 : f32
    %9 = vector.broadcast %cst_6 : f32 to vector<8x128xf32>
    %10 = arith.maximumf %8, %9 : vector<8x128xf32>
    %c0_7 = arith.constant 0 : index
    %c0_8 = arith.constant 0 : index
    %11 = vector.load %arg7[%c0_7, %c0_8] : memref<8x128xf32, #tpu.memory_space<vmem>>, vector<8x128xf32>
    %12 = vector.shape_cast %10 : vector<8x128xf32> to vector<1x8x128xf32>
    %cst_9 = arith.constant dense<0.000000e+00> : vector<8x128xf32>
    %13 = vector.multi_reduction <add>, %12, %cst_9 [0] : vector<1x8x128xf32> to vector<8x128xf32>
    %14 = arith.addf %11, %13 : vector<8x128xf32>
    %c0_10 = arith.constant 0 : index
    %c0_11 = arith.constant 0 : index
    %15 = vector.load %arg7[%c0_10, %c0_11] : memref<8x128xf32, #tpu.memory_space<vmem>>, vector<8x128xf32>
    tpu.vector_store %arg7[%c0_10, %c0_11], %14 {strides = array<i32>} : memref<8x128xf32, #tpu.memory_space<vmem>>, vector<8x128xf32>,
    return
  }
  func.func @transform_0(%arg0: i32, %arg1: i32) -> (i32, i32) {
    %c0_i32 = arith.constant 0 : i32
    %c0_i32_0 = arith.constant 0 : i32
    %c0_i32_1 = arith.constant 0 : i32
    return %c0_i32, %c0_i32_0 : i32, i32
  }
  func.func @transform_1(%arg0: i32, %arg1: i32) -> (i32, i32) {
    %c1_i32 = arith.constant 1 : i32
    %0 = arith.muli %arg0, %c1_i32 : i32
    %1 = arith.addi %0, %arg1 : i32
    %c0_i32 = arith.constant 0 : i32
    %c0_i32_0 = arith.constant 0 : i32
    return %1, %c0_i32 : i32, i32
  }
  func.func @transform_2(%arg0: i32, %arg1: i32) -> (i32, i32) {
    %c0_i32 = arith.constant 0 : i32
    %c0_i32_0 = arith.constant 0 : i32
    %c0_i32_1 = arith.constant 0 : i32
    return %c0_i32, %c0_i32_0 : i32, i32
  }
  func.func @transform_3(%arg0: i32, %arg1: i32) -> (i32, i32) {
    %c0_i32 = arith.constant 0 : i32
    %c0_i32_0 = arith.constant 0 : i32
    %c0_i32_1 = arith.constant 0 : i32
    return %c0_i32, %c0_i32_0 : i32, i32
  }
  func.func @transform_4(%arg0: i32, %arg1: i32) -> (i32, i32) {
    %c0_i32 = arith.constant 0 : i32
    %c0_i32_0 = arith.constant 0 : i32
    %c0_i32_1 = arith.constant 0 : i32
    return %c0_i32, %c0_i32_0 : i32, i32
  }
  func.func @transform_5(%arg0: i32, %arg1: i32) -> (i32, i32) {
    %c0_i32 = arith.constant 0 : i32
    %c0_i32_0 = arith.constant 0 : i32
    return %arg0, %c0_i32 : i32, i32
  }
}

</mosaic_0001>

<llo_original>
// kernel: tpu_custom_call.1
$region0: #{tpu_custom_call.1}
  #allocation0 [shape = 'u32[]', space=smem, size = 0x4, offset = 0x4, fixed_abs, tag = 'smem constant byte address 0x4 - core index']
  #allocation1 [shape = 'u32[144,128]{1,0:T(1,128)}', space=vmem, size = 0x12000, scoped, tag = 'internal scratch']
  #allocation2 [shape = 'f32[1,128]{1,0:T(1,128)}', space=vmem, size = 0x200, scoped, tag = 'scratch operand']
  %s0 = inlined_call_operand.hbm [shape: f32[1,16], index: 0, kind: input, shape index: {}]
  %s1 = inlined_call_operand.hbm [shape: f32[8,16], index: 1, kind: input, shape index: {}]
  %s2 = inlined_call_operand.hbm [shape: f32[16,128], index: 2, kind: input, shape index: {}]
  %s3 = inlined_call_operand.hbm [shape: f32[16,128], index: 3, kind: input, shape index: {}]
  %s4 = inlined_call_operand.vmem [shape: f32[1,128], index: 4, kind: input, shape index: {}]
  %s5 = inlined_call_operand.hbm [shape: f32[8,128], index: 5, kind: output, shape index: {}]
  %s6 = sld [smem:[#allocation0]]
  $region50: #{tpu_custom_call.1} parent=0
    _
  %s8 = ssub.s32 1, %s6
  %s9 = scalar_select 0, %s8, %s6
  $region1: #{tpu_custom_call.1} parent=0
    #allocation3 [shape = 'u8[512]{0}', space=vmem, size = 0x400, scoped, tag = 'input window, operand 0, single buffered']
    #allocation4 [shape = 's32[1]{0}', space=sflag, size = 0x4, scoped, tag = 'scoped memory for tpu_custom_call.1']
    #allocation5 [shape = 's32[1]{0}', space=sflag, size = 0x4, scoped, tag = 'scoped memory for tpu_custom_call.1']
    #allocation6 [shape = 'u8[4096]{0}', space=vmem, size = 0x1000, scoped, tag = 'input window, operand 1, single buffered']
    #allocation7 [shape = 's32[1]{0}', space=sflag, size = 0x4, scoped, tag = 'scoped memory for tpu_custom_call.1']
    #allocation8 [shape = 'u8[8192]{0}', space=vmem, size = 0x2000, scoped, tag = 'input window, operand 2, single buffered']
    #allocation9 [shape = 'u8[8192]{0}', space=vmem, size = 0x2000, scoped, tag = 'input window, operand 3, single buffered']
    #allocation10 [shape = 's32[1]{0}', space=sflag, size = 0x4, scoped, tag = 'scoped memory for tpu_custom_call.1']
    #allocation11 [shape = 'u8[4096]{0}', space=vmem, size = 0x1000, scoped, tag = 'output window, operand 0, single buffered']
    %10 = vsyncpa [#allocation4], 0
    %11 = vsyncpa [#allocation7], 0
    %12 = vsyncpa [#allocation10], 0
    %13 = vsyncpa [#allocation5], 0
    // Predicated region
    $region2: #{tpu_custom_call.1} parent=1 // pred_check
      _
    $region3: #{tpu_custom_call.1} parent=1 // pred_check_branch
      %15 = sbr.rel (0) target = $region5
    $region4: #{tpu_custom_call.1} parent=1 // pred_region
      %s17 = ssub.s32 16, 16
      %18 = vsyncadd [#allocation4], %s17
      %s20 = sshll.u32 [#allocation3], 4
      %s21 = int_to_ptr.vmem [resolvable:$true] %s20
      %23 = dma.hbm_to_vmem [thread:$0]  %s0, 16, %s21, [#allocation4]
    $region5: #{tpu_custom_call.1} parent=1 // pred_fallthru
      _
    // Predicated region
    $region6: #{tpu_custom_call.1} parent=1 // pred_check
      _
    $region7: #{tpu_custom_call.1} parent=1 // pred_check_branch
      %25 = sbr.rel (0) target = $region9
    $region8: #{tpu_custom_call.1} parent=1 // pred_region
      %s26 = sadd.s32 0, 0
      %s28 = ssub.s32 128, 128
      %29 = vsyncadd [#allocation7], %s28
      %s30 = smul.addr %s26, 128
      %s31 = scalar_lea.hbm %s1, %s30
      %s33 = sshll.u32 [#allocation6], 4
      %s34 = int_to_ptr.vmem [resolvable:$true] %s33
      %36 = dma.hbm_to_vmem [thread:$0]  %s31, 128, %s34, [#allocation7]
    $region9: #{tpu_custom_call.1} parent=1 // pred_fallthru
      _
    // Predicated region
    $region10: #{tpu_custom_call.1} parent=1 // pred_check
      _
    $region11: #{tpu_custom_call.1} parent=1 // pred_check_branch
      %38 = sbr.rel (0) target = $region13
    $region12: #{tpu_custom_call.1} parent=1 // pred_region
      %s40 = ssub.s32 256, 256
      %41 = vsyncadd [#allocation7], %s40
      %s42 = sshll.u32 [#allocation8], 4
      %s43 = int_to_ptr.vmem [resolvable:$true] %s42
      %48 = dma.hbm_to_vmem [thread:$0]  %s2, 256, %s43, [#allocation7], 128, 128, 8
    $region13: #{tpu_custom_call.1} parent=1 // pred_fallthru
      _
    // Predicated region
    $region14: #{tpu_custom_call.1} parent=1 // pred_check
      _
    $region15: #{tpu_custom_call.1} parent=1 // pred_check_branch
      %50 = sbr.rel (0) target = $region17
    $region16: #{tpu_custom_call.1} parent=1 // pred_region
      %s52 = ssub.s32 256, 256
      %53 = vsyncadd [#allocation10], %s52
      %s54 = sshll.u32 [#allocation9], 4
      %s55 = int_to_ptr.vmem [resolvable:$true] %s54
      %60 = dma.hbm_to_vmem [thread:$0]  %s3, 256, %s55, [#allocation10], 128, 128, 8
    $region17: #{tpu_custom_call.1} parent=1 // pred_fallthru
      _
    // Predicated region
    $region18: #{tpu_custom_call.1} parent=1 // pred_check
      _
    $region19: #{tpu_custom_call.1} parent=1 // pred_check_branch
      %62 = sbr.rel (0) target = $region21
    $region20: #{tpu_custom_call.1} parent=1 // pred_region
      _
    $region21: #{tpu_custom_call.1} parent=1 // pred_fallthru
      _
    // Predicated region
    $region22: #{tpu_custom_call.1} parent=1 // pred_check
      _
    $region23: #{tpu_custom_call.1} parent=1 // pred_check_branch
      %64 = sbr.rel (0) target = $region25
    $region24: #{tpu_custom_call.1} parent=1 // pred_region
      %65 = dma.done [#allocation4], 16
    $region25: #{tpu_custom_call.1} parent=1 // pred_fallthru
      _
    // Predicated region
    $region26: #{tpu_custom_call.1} parent=1 // pred_check
      _
    $region27: #{tpu_custom_call.1} parent=1 // pred_check_branch
      %67 = sbr.rel (0) target = $region29
    $region28: #{tpu_custom_call.1} parent=1 // pred_region
      %68 = dma.done [#allocation7], 128
    $region29: #{tpu_custom_call.1} parent=1 // pred_fallthru
      _
    // Predicated region
    $region30: #{tpu_custom_call.1} parent=1 // pred_check
      _
    $region31: #{tpu_custom_call.1} parent=1 // pred_check_branch
      %70 = sbr.rel (0) target = $region33
    $region32: #{tpu_custom_call.1} parent=1 // pred_region
      %71 = dma.done [#allocation7], 256
    $region33: #{tpu_custom_call.1} parent=1 // pred_fallthru
      _
    // Predicated region
    $region34: #{tpu_custom_call.1} parent=1 // pred_check
      _
    $region35: #{tpu_custom_call.1} parent=1 // pred_check_branch
      %73 = sbr.rel (0) target = $region37
    $region36: #{tpu_custom_call.1} parent=1 // pred_region
      %74 = dma.done [#allocation10], 256
    $region37: #{tpu_custom_call.1} parent=1 // pred_fallthru
      _
    %s75 = sadd.s32 0, 0
    %p76 = scmp.eq.s32.totalorder 0, 0
    // Predicated region
    $region38: #{tpu_custom_call.1} parent=1 // pred_check
      %p77 = pneg %p76
    $region39: #{tpu_custom_call.1} parent=1 // pred_check_branch
      %79 = sbr.rel (%p77) target = $region41
    $region40: #{tpu_custom_call.1} parent=1 // pred_region
      %80 = vst [vmem:[#allocation11] sm:$0xff] 0.0
      %v81 = vld [vmem:[#allocation3] sm:$0x1]
      %v82 = vld [vmem:[#allocation8] sm:$0xff]
      %v83 = vld [vmem:[#allocation8 + $0x8] sm:$0xff]
      %v84 = vld [vmem:[%s4] sm:$0x1]
      %vm85 = vcmask 130048
      %v87 = vsel %vm85, %v81, 0
      %89 = vmatprep.subr.mxu0 0.0
      %90 = vmatpush1.msra.mxu0 %v82
      %91 = vmatprep.subr.mxu0 0.0
      %92 = vmatpush1.msra.mxu0 %v83
      %93 = vmatprep.subr.mxu0 0.0
      %94 = vmatpush1.msra.mxu0 0.0
      %95 = vmatprep.subr.mxu0 0.0
      %96 = vmatpush1.msra.mxu0 0.0
      %97 = vmatprep.subr.mxu0 0.0
      %98 = vmatpush1.msra.mxu0 0.0
      %99 = vmatprep.subr.mxu0 0.0
      %100 = vmatpush1.msra.mxu0 0.0
      %101 = vmatprep.subr.mxu0 0.0
      %102 = vmatpush1.msra.mxu0 0.0
      %103 = vmatprep.subr.mxu0 0.0
      %104 = vmatpush1.msra.mxu0 0.0
      %105 = vmatprep.subr.mxu0 0.0
      %106 = vmatpush1.msra.mxu0 0.0
      %107 = vmatprep.subr.mxu0 0.0
      %108 = vmatpush1.msra.mxu0 0.0
      %109 = vmatprep.subr.mxu0 0.0
      %110 = vmatpush1.msra.mxu0 0.0
      %111 = vmatprep.subr.mxu0 0.0
      %112 = vmatpush1.msra.mxu0 0.0
      %113 = vmatprep.subr.mxu0 0.0
      %114 = vmatpush1.msra.mxu0 0.0
      %115 = vmatprep.subr.mxu0 0.0
      %116 = vmatpush1.msra.mxu0 0.0
      %117 = vmatprep.subr.mxu0 0.0
      %118 = vmatpush1.msra.mxu0 0.0
      %119 = vmatprep.subr.mxu0 0.0
      %120 = vmatpush1.msra.mxu0 0.0
      %121 = vmatprep.subr.mxu0 0.0
      %122 = vmatpush1.msra.mxu0 0.0
      %123 = vmatprep.subr.mxu0 0.0
      %124 = vmatpush1.msra.mxu0 0.0
      %125 = vmatprep.subr.mxu0 0.0
      %126 = vmatpush1.msra.mxu0 0.0
      %127 = vmatprep.subr.mxu0 0.0
      %128 = vmatpush1.msra.mxu0 0.0
      %129 = vmatprep.subr.mxu0 0.0
      %130 = vmatpush1.msra.mxu0 0.0
      %131 = vmatprep.subr.mxu0 0.0
      %132 = vmatpush1.msra.mxu0 0.0
      %133 = vmatprep.subr.mxu0 0.0
      %134 = vmatpush1.msra.mxu0 0.0
      %135 = vmatprep.subr.mxu0 0.0
      %136 = vmatpush1.msra.mxu0 0.0
      %137 = vmatprep.subr.mxu0 0.0
      %138 = vmatpush1.msra.mxu0 0.0
      %139 = vmatprep.subr.mxu0 0.0
      %140 = vmatpush1.msra.mxu0 0.0
      %141 = vmatprep.subr.mxu0 0.0
      %142 = vmatpush1.msra.mxu0 0.0
      %143 = vmatprep.subr.mxu0 0.0
      %144 = vmatpush1.msra.mxu0 0.0
      %145 = vmatprep.subr.mxu0 0.0
      %146 = vmatpush1.msra.mxu0 0.0
      %147 = vmatprep.subr.mxu0 0.0
      %148 = vmatpush1.msra.mxu0 0.0
      %149 = vmatprep.subr.mxu0 0.0
      %150 = vmatpush1.msra.mxu0 0.0
      %151 = vmatprep.subr.mxu0 0.0
      %152 = vmatpush1.msra.mxu0 0.0
      %153 = vmatprep.mubr.f32.mxu0 0.0
      %154 = vmatmul.mubr.f32.gmra.mrb[0].mxu0 %v87
      %v155 = vpop.f32.mrb[0].mxu0
      %v156 = vadd.f32 %v84, %v155
      %v157 = vpop.f32.mrb[0].mxu0
      %158 = vdwg.mxu0
      %159 = vst [vmem:[#allocation2] sm:$0x1] %v156
    $region41: #{tpu_custom_call.1} parent=1 // pred_fallthru
      _
    %v160 = vld [vmem:[#allocation6] sm:$0xff]
    %v161 = vld [vmem:[#allocation9] sm:$0xff]
    %v162 = vld [vmem:[#allocation9 + $0x8] sm:$0xff]
    %v163 = vld [vmem:[#allocation2] sm:$0x1]
    %v165 = vlaneseq
    %v166 = vshrl.u32 %v165, 7
    %v167 = vsub.s32 0, %v166
    %v168 = vrot.slane %v163, %v167
    %vm170 = vcmask 130048
    %v172 = vsel %vm170, %v160, 0
    %174 = vmatprep.subr.mxu0 0.0
    %175 = vmatpush1.msra.mxu0 %v161
    %176 = vmatprep.subr.mxu0 0.0
    %177 = vmatpush1.msra.mxu0 %v162
    %178 = vmatprep.subr.mxu0 0.0
    %179 = vmatpush1.msra.mxu0 0.0
    %180 = vmatprep.subr.mxu0 0.0
    %181 = vmatpush1.msra.mxu0 0.0
    %182 = vmatprep.subr.mxu0 0.0
    %183 = vmatpush1.msra.mxu0 0.0
    %184 = vmatprep.subr.mxu0 0.0
    %185 = vmatpush1.msra.mxu0 0.0
    %186 = vmatprep.subr.mxu0 0.0
    %187 = vmatpush1.msra.mxu0 0.0
    %188 = vmatprep.subr.mxu0 0.0
    %189 = vmatpush1.msra.mxu0 0.0
    %190 = vmatprep.subr.mxu0 0.0
    %191 = vmatpush1.msra.mxu0 0.0
    %192 = vmatprep.subr.mxu0 0.0
    %193 = vmatpush1.msra.mxu0 0.0
    %194 = vmatprep.subr.mxu0 0.0
    %195 = vmatpush1.msra.mxu0 0.0
    %196 = vmatprep.subr.mxu0 0.0
    %197 = vmatpush1.msra.mxu0 0.0
    %198 = vmatprep.subr.mxu0 0.0
    %199 = vmatpush1.msra.mxu0 0.0
    %200 = vmatprep.subr.mxu0 0.0
    %201 = vmatpush1.msra.mxu0 0.0
    %202 = vmatprep.subr.mxu0 0.0
    %203 = vmatpush1.msra.mxu0 0.0
    %204 = vmatprep.subr.mxu0 0.0
    %205 = vmatpush1.msra.mxu0 0.0
    %206 = vmatprep.subr.mxu0 0.0
    %207 = vmatpush1.msra.mxu0 0.0
    %208 = vmatprep.subr.mxu0 0.0
    %209 = vmatpush1.msra.mxu0 0.0
    %210 = vmatprep.subr.mxu0 0.0
    %211 = vmatpush1.msra.mxu0 0.0
    %212 = vmatprep.subr.mxu0 0.0
    %213 = vmatpush1.msra.mxu0 0.0
    %214 = vmatprep.subr.mxu0 0.0
    %215 = vmatpush1.msra.mxu0 0.0
    %216 = vmatprep.subr.mxu0 0.0
    %217 = vmatpush1.msra.mxu0 0.0
    %218 = vmatprep.subr.mxu0 0.0
    %219 = vmatpush1.msra.mxu0 0.0
    %220 = vmatprep.subr.mxu0 0.0
    %221 = vmatpush1.msra.mxu0 0.0
    %222 = vmatprep.subr.mxu0 0.0
    %223 = vmatpush1.msra.mxu0 0.0
    %224 = vmatprep.subr.mxu0 0.0
    %225 = vmatpush1.msra.mxu0 0.0
    %226 = vmatprep.subr.mxu0 0.0
    %227 = vmatpush1.msra.mxu0 0.0
    %228 = vmatprep.subr.mxu0 0.0
    %229 = vmatpush1.msra.mxu0 0.0
    %230 = vmatprep.subr.mxu0 0.0
    %231 = vmatpush1.msra.mxu0 0.0
    %232 = vmatprep.subr.mxu0 0.0
    %233 = vmatpush1.msra.mxu0 0.0
    %234 = vmatprep.subr.mxu0 0.0
    %235 = vmatpush1.msra.mxu0 0.0
    %236 = vmatprep.subr.mxu0 0.0
    %237 = vmatpush1.msra.mxu0 0.0
    %238 = vmatprep.mubr.f32.mxu0 0.0
    %239 = vmatmul.mubr.f32.gmra.mrb[0].mxu0 %v172
    %v240 = vpop.f32.mrb[0].mxu0
    %v241 = vadd.f32 %v168, %v240
    %v242 = vpop.f32.mrb[0].mxu0
    %243 = vdwg.mxu0
    %v244 = vmax.f32 %v241, 0.0
    %v245 = vld [vmem:[#allocation11] sm:$0xff]
    %v246 = vadd.f32 %v244, 0.0
    %v247 = vadd.f32 %v245, %v246
    %248 = vst [vmem:[#allocation11] sm:$0xff] %v247
    // Predicated region
    $region42: #{tpu_custom_call.1} parent=1 // pred_check
      _
    $region43: #{tpu_custom_call.1} parent=1 // pred_check_branch
      %250 = sbr.rel (0) target = $region45
    $region44: #{tpu_custom_call.1} parent=1 // pred_region
      %s252 = ssub.s32 128, 128
      %253 = vsyncadd [#allocation5], %s252
      %s255 = sshll.u32 [#allocation11], 4
      %s256 = int_to_ptr.vmem [resolvable:$true] %s255
      %258 = dma.vmem_to_hbm [thread:$0]  %s256, 128, %s5, [#allocation5]
    $region45: #{tpu_custom_call.1} parent=1 // pred_fallthru
      _
    // Predicated region
    $region46: #{tpu_custom_call.1} parent=1 // pred_check
      _
    $region47: #{tpu_custom_call.1} parent=1 // pred_check_branch
      %260 = sbr.rel (0) target = $region49
    $region48: #{tpu_custom_call.1} parent=1 // pred_region
      %261 = dma.done [#allocation5], 128
    $region49: #{tpu_custom_call.1} parent=1 // pred_fallthru
      _
    %262 = vsyncpa [#allocation4], 1
    %263 = vsyncpa [#allocation7], 1
    %264 = vsyncpa [#allocation10], 1
    %265 = vsyncpa [#allocation5], 1

</llo_original>
